<compile_context>
chip_gen: v5e
topology: v5e:2x2
jax: 0.10.0
libtpu: 0.0.40
codegen_flags: <defaults>
</compile_context>

<pallas_src>
import functools

import jax
import jax.numpy as jnp
from jax.experimental import pallas as pl
from jax.experimental.pallas import tpu as pltpu


# ----------------------------- kernel ---------------------------------------


def _elements_kernel(packed_ref, lin_rhs_ref, cat_rhs_ref, aux_ref, out_ref, *, is_tm):
    info = packed_ref[...]                              # (T, 8): [5 floats | an | et | mask]
    mask = info[:, 7:8]                                 # (T, 1)
    an = info[:, 5:6].astype(jnp.int32)                 # (T, 1)
    T = info.shape[0]
    cat = cat_rhs_ref.shape[0]
    col = jax.lax.broadcasted_iota(jnp.int32, (T, cat), 1)

    if is_tm:
        # map_TM_atomic_number: 21..30 -> an-20, 39..48 -> an-28, masked/0 -> 0
        mapped = jnp.where(an <= 0, 0, jnp.where(an <= 30, an - 20, an - 28))
        one_hot = (col == mapped).astype(jnp.float32)                       # (T, 21)
    else:
        et = info[:, 6:7].astype(jnp.int32)
        # map_NotTM_atomic_number: 1..20 -> an, 31..38 -> an-10, 49..94 -> an-20
        mapped = jnp.where(an <= 0, 0,
                 jnp.where(an <= 20, an,
                 jnp.where(an <= 38, an - 10, an - 20)))
        # columns [0,75): atomic-number one-hot; columns [75,81): type one-hot
        one_hot = jnp.logical_or(col == mapped, col == et + 75).astype(jnp.float32)

    # Fused Linear + embedding(s): rows 5..7 of lin_rhs are zero, so the raw
    # an/et/mask columns contribute nothing; the embedding tables live in the
    # upper output columns of cat_rhs.
    z = jnp.dot(info, lin_rhs_ref[...], preferred_element_type=jnp.float32)
    z = z + jnp.dot(one_hot, cat_rhs_ref[...], preferred_element_type=jnp.float32)

    # aux row 0 = [bias(16) | 0...], row 1 = [0(16) | FLT_MIN...]:
    # ReLU only on the 16 linear columns, identity on embedding columns.
    out_ref[...] = jnp.maximum(z + aux_ref[0:1, :], aux_ref[1:2, :]) * mask


# ----------------------------- wrapper ---------------------------------------


def _round_up(x, m):
    return (x + m - 1) // m * m


def _build_fused_params(params, is_tm):
    w = params["w"].astype(jnp.float32)                      # (5, 16)
    b = params["b"].reshape(1, 16).astype(jnp.float32)
    if is_tm:
        out_dim, cat = 24, 21
        cat_rhs = jnp.zeros((cat, out_dim), jnp.float32)
        cat_rhs = cat_rhs.at[:, 16:24].set(params["tm_tab"].astype(jnp.float32))
    else:
        out_dim, cat = 28, 81
        cat_rhs = jnp.zeros((cat, out_dim), jnp.float32)
        cat_rhs = cat_rhs.at[0:75, 16:24].set(params["nt1"].astype(jnp.float32))
        cat_rhs = cat_rhs.at[75:81, 24:28].set(params["nt2"].astype(jnp.float32))
    lin_rhs = jnp.zeros((8, out_dim), jnp.float32).at[0:5, 0:16].set(w)
    aux = jnp.zeros((2, out_dim), jnp.float32)
    aux = aux.at[0, 0:16].set(b[0])
    aux = aux.at[1, 16:out_dim].set(jnp.finfo(jnp.float32).min)
    return lin_rhs, cat_rhs, aux, out_dim


def elements_feature_processor(elements_info, elements_mask, params, is_tm=True,
                               row_tile=2048):
    """Pallas version of ElementsFeatureProcessor.forward.

    elements_info: (B, N, 7) float32  [5 float feats | atomic_number | element_type]
    elements_mask: (B, N)     (0/1)
    returns (B, N, 24) if is_tm else (B, N, 28), float32
    """
    B, N, F = elements_info.shape
    assert F == 7
    M = B * N

    lin_rhs, cat_rhs, aux, out_dim = _build_fused_params(params, is_tm)

    info2 = elements_info.reshape(M, F).astype(jnp.float32)
    mask2 = elements_mask.reshape(M, 1).astype(jnp.float32)
    packed = jnp.concatenate([info2, mask2], axis=1)           # (M, 8), lane-dense

    tile = min(row_tile, _round_up(M, 8))                      # multiple of 8
    Mp = _round_up(M, tile)
    if Mp != M:
        packed = jnp.pad(packed, ((0, Mp - M), (0, 0)))        # pad rows have mask 0

    kernel = functools.partial(_elements_kernel, is_tm=is_tm)
    out = pl.pallas_call(
        kernel,
        out_shape=jax.ShapeDtypeStruct((Mp, out_dim), jnp.float32),
        grid=(Mp // tile,),
        in_specs=[
            pl.BlockSpec((tile, 8), lambda i: (i, 0)),          # streamed rows
            pl.BlockSpec(lin_rhs.shape, lambda i: (0, 0)),      # VMEM-resident weights
            pl.BlockSpec(cat_rhs.shape, lambda i: (0, 0)),      # VMEM-resident tables
            pl.BlockSpec(aux.shape, lambda i: (0, 0)),          # bias / relu-floor rows
        ],
        out_specs=pl.BlockSpec((tile, out_dim), lambda i: (i, 0)),
        compiler_params=pltpu.CompilerParams(
            dimension_semantics=("parallel",)),
    )(packed, lin_rhs, cat_rhs, aux)
    return out[:M].reshape(B, N, out_dim)


# ----------------------------- reference ------------------------------------


def ref_forward(elements_info, elements_mask, params, is_tm=True):
    maskf = elements_mask[..., None].astype(jnp.float32)
    mi = elements_info.astype(jnp.float32) * maskf
    ff = mi[..., :5]
    an = mi[..., 5].astype(jnp.int32)
    et = mi[..., 6].astype(jnp.int32)
    feat = jax.nn.relu(ff @ params["w"] + params["b"][0])
    if is_tm:
        mapped = jnp.where(an <= 0, 0, jnp.where(an <= 30, an - 20, an - 28))
        emb_z = params["tm_tab"][mapped]
        out = jnp.concatenate([feat, emb_z], axis=-1)
    else:
        mapped = jnp.where(an <= 0, 0,
                 jnp.where(an <= 20, an,
                 jnp.where(an <= 38, an - 10, an - 20)))
        emb_z = params["nt1"][mapped]
        emb_t = params["nt2"][et]
        out = jnp.concatenate([feat, emb_z, emb_t], axis=-1)
    return out * maskf


# ----------------------------- main ------------------------------------------


if __name__ == "__main__":
    key = jax.random.PRNGKey(0)
    ks = jax.random.split(key, 12)

    # Deterministic parameter init (shapes from nn.Module __init__).
    params = {
        "w": 0.1 * jax.random.normal(ks[0], (5, 16), jnp.float32),    # Linear(5,16) weight (in,out)
        "b": 0.1 * jax.random.normal(ks[1], (1, 16), jnp.float32),    # Linear bias
        "tm_tab": jax.random.normal(ks[2], (21, 8), jnp.float32),     # TM_embedding1
        "nt1": jax.random.normal(ks[3], (75, 8), jnp.float32),        # NotTM_embedding1
        "nt2": jax.random.normal(ks[4], (6, 4), jnp.float32),         # NotTM_embedding2
    }

    B, N = 2, 8
    floats = jax.random.normal(ks[5], (B, N, 5), jnp.float32)
    etype = jax.random.randint(ks[6], (B, N, 1), 0, 6).astype(jnp.float32)
    mask = (jax.random.uniform(ks[7], (B, N)) < 0.8).astype(jnp.float32)

    # Valid TM atomic numbers: 21..30 and 39..48
    idx_tm = jax.random.randint(ks[8], (B, N, 1), 0, 20)
    an_tm = jnp.where(idx_tm < 10, 21 + idx_tm, 39 + (idx_tm - 10)).astype(jnp.float32)
    info_tm = jnp.concatenate([floats, an_tm, etype], axis=-1)

    # Valid non-TM atomic numbers: 1..20, 31..38, 49..94
    idx_nt = jax.random.randint(ks[9], (B, N, 1), 0, 74)
    an_nt = jnp.where(idx_nt < 20, 1 + idx_nt,
            jnp.where(idx_nt < 28, 31 + (idx_nt - 20), 49 + (idx_nt - 28))).astype(jnp.float32)
    info_nt = jnp.concatenate([floats, an_nt, etype], axis=-1)

    # is_tm=True path
    out_tm = elements_feature_processor(info_tm, mask, params, is_tm=True)
    jax.block_until_ready(out_tm)
    ref_tm = ref_forward(info_tm, mask, params, is_tm=True)
    assert out_tm.shape == (B, N, 24)
    assert jnp.allclose(out_tm, ref_tm, atol=1e-5, rtol=1e-5)

    # is_tm=False path
    out_nt = elements_feature_processor(info_nt, mask, params, is_tm=False)
    jax.block_until_ready(out_nt)
    ref_nt = ref_forward(info_nt, mask, params, is_tm=False)
    assert out_nt.shape == (B, N, 28)
    assert jnp.allclose(out_nt, ref_nt, atol=1e-5, rtol=1e-5)

    print("KERNEL_OK")
</pallas_src>

<mosaic_0001>
module attributes {stable_mosaic.version = 11 : i64} {
  func.func @_elements_kernel(%arg0: i32, %arg1: memref<16x8xf32, #tpu.memory_space<vmem>>, %arg2: memref<8x24xf32, #tpu.memory_space<vmem>>, %arg3: memref<21x24xf32, #tpu.memory_space<vmem>>, %arg4: memref<2x24xf32, #tpu.memory_space<vmem>>, %arg5: memref<16x24xf32, #tpu.memory_space<vmem>>) attributes {dimension_semantics = [#tpu.dimension_semantics<parallel>], iteration_bounds = array<i64: 1>, scalar_prefetch = 0 : i64, scratch_operands = 0 : i64, tpu.core_type = #tpu.core_type<tc>, window_params = [{transform_indices = @transform_0, window_bounds = array<i64: 16, 8>}, {pipeline_mode = #tpu.pipeline_mode<synchronous>, transform_indices = @transform_1, window_bounds = array<i64: 8, 24>}, {pipeline_mode = #tpu.pipeline_mode<synchronous>, transform_indices = @transform_2, window_bounds = array<i64: 21, 24>}, {pipeline_mode = #tpu.pipeline_mode<synchronous>, transform_indices = @transform_3, window_bounds = array<i64: 2, 24>}, {transform_indices = @transform_4, window_bounds = array<i64: 16, 24>}]} {
    %c0 = arith.constant 0 : index
    %c0_0 = arith.constant 0 : index
    %0 = vector.load %arg1[%c0, %c0_0] : memref<16x8xf32, #tpu.memory_space<vmem>>, vector<16x8xf32>
    %1 = vector.extract_strided_slice %0 {offsets = [0, 7], sizes = [16, 1], strides = [1, 1]} : vector<16x8xf32> to vector<16x1xf32>
    %2 = vector.extract_strided_slice %0 {offsets = [0, 5], sizes = [16, 1], strides = [1, 1]} : vector<16x8xf32> to vector<16x1xf32>
    %3 = arith.fptosi %2 : vector<16x1xf32> to vector<16x1xi32>
    %4 = tpu.iota {dimensions = array<i32: 1>} : vector<16x21xi32>
    %c0_i32 = arith.constant 0 : i32
    %5 = vector.broadcast %c0_i32 : i32 to vector<16x1xi32>
    %6 = arith.cmpi sle, %3, %5 : vector<16x1xi32>
    %c30_i32 = arith.constant 30 : i32
    %7 = vector.broadcast %c30_i32 : i32 to vector<16x1xi32>
    %8 = arith.cmpi sle, %3, %7 : vector<16x1xi32>
    %c20_i32 = arith.constant 20 : i32
    %9 = vector.broadcast %c20_i32 : i32 to vector<16x1xi32>
    %10 = arith.subi %3, %9 : vector<16x1xi32>
    %c28_i32 = arith.constant 28 : i32
    %11 = vector.broadcast %c28_i32 : i32 to vector<16x1xi32>
    %12 = arith.subi %3, %11 : vector<16x1xi32>
    %13 = arith.select %8, %10, %12 : vector<16x1xi1>, vector<16x1xi32>
    %c0_i32_1 = arith.constant 0 : i32
    %14 = vector.broadcast %c0_i32_1 : i32 to vector<16x1xi32>
    %15 = arith.select %6, %14, %13 : vector<16x1xi1>, vector<16x1xi32>
    %16 = vector.broadcast %15 : vector<16x1xi32> to vector<16x21xi32>
    %17 = arith.cmpi eq, %4, %16 : vector<16x21xi32>
    %18 = arith.extui %17 : vector<16x21xi1> to vector<16x21xi32>
    %19 = arith.sitofp %18 : vector<16x21xi32> to vector<16x21xf32>
    %c0_2 = arith.constant 0 : index
    %c0_3 = arith.constant 0 : index
    %20 = vector.load %arg2[%c0_2, %c0_3] : memref<8x24xf32, #tpu.memory_space<vmem>>, vector<8x24xf32>
    %cst = arith.constant dense<0.000000e+00> : vector<16x24xf32>
    %21 = tpu.matmul %0, %20, %cst {dimension_numbers = #tpu.dot_dimension_numbers<[1], [0], [0], [1], [0, 0, 1, 1], [], []>} : vector<16x8xf32>, vector<8x24xf32>, vector<16x24xf32> -> vector<16x24xf32>
    %c0_4 = arith.constant 0 : index
    %c0_5 = arith.constant 0 : index
    %22 = vector.load %arg3[%c0_4, %c0_5] : memref<21x24xf32, #tpu.memory_space<vmem>>, vector<21x24xf32>
    %cst_6 = arith.constant dense<0.000000e+00> : vector<16x24xf32>
    %23 = tpu.matmul %19, %22, %cst_6 {dimension_numbers = #tpu.dot_dimension_numbers<[1], [0], [0], [1], [0, 0, 1, 1], [], []>} : vector<16x21xf32>, vector<21x24xf32>, vector<16x24xf32> -> vector<16x24xf32>
    %24 = arith.addf %21, %23 : vector<16x24xf32>
    %c0_7 = arith.constant 0 : index
    %c0_8 = arith.constant 0 : index
    %25 = vector.load %arg4[%c0_7, %c0_8] : memref<2x24xf32, #tpu.memory_space<vmem>>, vector<1x24xf32>
    %26 = vector.broadcast %25 : vector<1x24xf32> to vector<16x24xf32>
    %27 = arith.addf %24, %26 : vector<16x24xf32>
    %c1 = arith.constant 1 : index
    %c0_9 = arith.constant 0 : index
    %28 = vector.load %arg4[%c1, %c0_9] : memref<2x24xf32, #tpu.memory_space<vmem>>, vector<1x24xf32>
    %29 = vector.broadcast %28 : vector<1x24xf32> to vector<16x24xf32>
    %30 = arith.maximumf %27, %29 : vector<16x24xf32>
    %31 = vector.broadcast %1 : vector<16x1xf32> to vector<16x24xf32>
    %32 = arith.mulf %30, %31 : vector<16x24xf32>
    %c0_10 = arith.constant 0 : index
    %c0_11 = arith.constant 0 : index
    %33 = vector.load %arg5[%c0_10, %c0_11] : memref<16x24xf32, #tpu.memory_space<vmem>>, vector<16x24xf32>
    tpu.vector_store %arg5[%c0_10, %c0_11], %32 {strides = array<i32>} : memref<16x24xf32, #tpu.memory_space<vmem>>, vector<16x24xf32>,
    return
  }
  func.func @transform_0(%arg0: i32) -> (i32, i32) {
    %c0_i32 = arith.constant 0 : i32
    %c0_i32_0 = arith.constant 0 : i32
    return %arg0, %c0_i32 : i32, i32
  }
  func.func @transform_1(%arg0: i32) -> (i32, i32) {
    %c0_i32 = arith.constant 0 : i32
    %c0_i32_0 = arith.constant 0 : i32
    %c0_i32_1 = arith.constant 0 : i32
    return %c0_i32, %c0_i32_0 : i32, i32
  }
  func.func @transform_2(%arg0: i32) -> (i32, i32) {
    %c0_i32 = arith.constant 0 : i32
    %c0_i32_0 = arith.constant 0 : i32
    %c0_i32_1 = arith.constant 0 : i32
    return %c0_i32, %c0_i32_0 : i32, i32
  }
  func.func @transform_3(%arg0: i32) -> (i32, i32) {
    %c0_i32 = arith.constant 0 : i32
    %c0_i32_0 = arith.constant 0 : i32
    %c0_i32_1 = arith.constant 0 : i32
    return %c0_i32, %c0_i32_0 : i32, i32
  }
  func.func @transform_4(%arg0: i32) -> (i32, i32) {
    %c0_i32 = arith.constant 0 : i32
    %c0_i32_0 = arith.constant 0 : i32
    return %arg0, %c0_i32 : i32, i32
  }
}

</mosaic_0001>

<llo_original>
// kernel: tpu_custom_call.1
$region0: #{tpu_custom_call.1}
  #allocation0 [shape = 'u32[]', space=smem, size = 0x4, offset = 0x4, fixed_abs, tag = 'smem constant byte address 0x4 - core index']
  #allocation1 [shape = 'u32[72,128]{1,0:T(1,128)}', space=vmem, size = 0x9000, scoped, tag = 'internal scratch']
  %s0 = inlined_call_operand.vmem [shape: f32[16,8], index: 0, kind: input, shape index: {}]
  %s1 = inlined_call_operand.hbm [shape: f32[8,24], index: 1, kind: input, shape index: {}]
  %s2 = inlined_call_operand.vmem [shape: f32[21,24], index: 2, kind: input, shape index: {}]
  %s3 = inlined_call_operand.vmem [shape: f32[2,24], index: 3, kind: input, shape index: {}]
  %s4 = inlined_call_operand.hbm [shape: f32[16,24], index: 4, kind: output, shape index: {}]
  %s5 = sld [smem:[#allocation0]]
  $region30: #{tpu_custom_call.1} parent=0
    _
  %s7 = ssub.s32 1, %s5
  %s8 = scalar_select 0, %s7, %s5
  $region1: #{tpu_custom_call.1} parent=0
    #allocation2 [shape = 'u8[4096]{0}', space=vmem, size = 0x1000, scoped, tag = 'input window, operand 1, single buffered']
    #allocation3 [shape = 's32[1]{0}', space=sflag, size = 0x4, scoped, tag = 'scoped memory for tpu_custom_call.1']
    #allocation4 [shape = 's32[1]{0}', space=sflag, size = 0x4, scoped, tag = 'scoped memory for tpu_custom_call.1']
    #allocation5 [shape = 'u8[8192]{0}', space=vmem, size = 0x2000, scoped, tag = 'output window, operand 0, single buffered']
    %9 = vsyncpa [#allocation3], 0
    %10 = vsyncpa [#allocation4], 0
    // Predicated region
    $region2: #{tpu_custom_call.1} parent=1 // pred_check
      _
    $region3: #{tpu_custom_call.1} parent=1 // pred_check_branch
      %12 = sbr.rel (0) target = $region5
    $region4: #{tpu_custom_call.1} parent=1 // pred_region
      _
    $region5: #{tpu_custom_call.1} parent=1 // pred_fallthru
      _
    // Predicated region
    $region6: #{tpu_custom_call.1} parent=1 // pred_check
      _
    $region7: #{tpu_custom_call.1} parent=1 // pred_check_branch
      %14 = sbr.rel (0) target = $region9
    $region8: #{tpu_custom_call.1} parent=1 // pred_region
      %16 = vsyncadd [#allocation3], 0
      %s18 = sshll.u32 %s1, 4
      %s19 = int_to_ptr.hbm [resolvable:$true] %s18
      %s20 = sshll.u32 [#allocation2], 4
      %s21 = int_to_ptr.vmem [resolvable:$true] %s20
      %23 = dma.hbm_to_vmem [thread:$0]  %s19, 128, %s21, [#allocation3]
    $region9: #{tpu_custom_call.1} parent=1 // pred_fallthru
      _
    // Predicated region
    $region10: #{tpu_custom_call.1} parent=1 // pred_check
      _
    $region11: #{tpu_custom_call.1} parent=1 // pred_check_branch
      %25 = sbr.rel (0) target = $region13
    $region12: #{tpu_custom_call.1} parent=1 // pred_region
      _
    $region13: #{tpu_custom_call.1} parent=1 // pred_fallthru
      _
    // Predicated region
    $region14: #{tpu_custom_call.1} parent=1 // pred_check
      _
    $region15: #{tpu_custom_call.1} parent=1 // pred_check_branch
      %27 = sbr.rel (0) target = $region17
    $region16: #{tpu_custom_call.1} parent=1 // pred_region
      _
    $region17: #{tpu_custom_call.1} parent=1 // pred_fallthru
      _
    // Predicated region
    $region18: #{tpu_custom_call.1} parent=1 // pred_check
      _
    $region19: #{tpu_custom_call.1} parent=1 // pred_check_branch
      %29 = sbr.rel (0) target = $region21
    $region20: #{tpu_custom_call.1} parent=1 // pred_region
      %31 = dma.done [#allocation3], 128
    $region21: #{tpu_custom_call.1} parent=1 // pred_fallthru
      _
    %v32 = vld [vmem:[%s0] sm:$0xff]
    %v33 = vld [vmem:[%s0 + $0x8] sm:$0xff]
    %v34 = vcvt.f32.s32.to.zero.pseudo %v32
    %v35 = vcvt.f32.s32.to.zero.pseudo %v33
    %v36 = vlaneseq
    %v37 = vand.u32 %v36, 127
    %vm38 = vcmp.le.s32.totalorder %v34, 0
    %vm39 = vcmp.le.s32.totalorder %v35, 0
    %vm40 = vcmp.le.s32.totalorder %v34, 30
    %vm41 = vcmp.le.s32.totalorder %v35, 30
    %v42 = vsub.s32 %v34, 20
    %v43 = vsub.s32 %v35, 20
    %v44 = vsub.s32 %v34, 28
    %v45 = vsub.s32 %v35, 28
    %v46 = vsel %vm40, %v42, %v44
    %v47 = vsel %vm41, %v43, %v45
    %v48 = vsel %vm38, 0, %v46
    %v49 = vsel %vm39, 0, %v47
    %50 = vset.pattern.permute.xlu0 5
    %51 = vperm.xlu0 %50, %v48
    %v52 = vpop.permute.xlu0 %51
    %53 = vset.pattern.permute.xlu0 5
    %54 = vperm.xlu0 %53, %v49
    %v55 = vpop.permute.xlu0 %54
    %vm56 = vcmp.eq.s32.totalorder %v37, %v52
    %vm57 = vcmp.eq.s32.totalorder %v37, %v55
    %v58 = vsel %vm56, 1, 0
    %v59 = vsel %vm57, 1, 0
    %v60 = vcvt.s32.f32 %v58
    %v61 = vcvt.s32.f32 %v59
    %v62 = vld [vmem:[#allocation2] sm:$0xff]
    %v63 = vld [vmem:[%s2] sm:$0xff]
    %v64 = vld [vmem:[%s2 + $0x8] sm:$0xff]
    %v65 = vld [vmem:[%s2 + $0x10] sm:$0x1f]
    %vm66 = vcmask 171008
    %v68 = vsel %vm66, %v60, 0
    %v71 = vsel %vm66, %v61, 0
    %vm73 = vcmask 1044480
    %v75 = vsel %vm73, %v65, 0
    %77 = vmatpush.msra.mxu0 0.0
    %78 = vmatpush.msra.mxu0 0.0
    %79 = vmatpush.msra.mxu0 0.0
    %80 = vmatpush.msra.mxu0 0.0
    %81 = vmatpush.msra.mxu0 0.0
    %82 = vmatpush.msra.mxu0 0.0
    %83 = vmatpush.msra.mxu0 0.0
    %84 = vmatpush.msra.mxu0 0.0
    %85 = vmatpush.msra.mxu0 0.0
    %86 = vmatpush.msra.mxu0 0.0
    %87 = vmatpush.msra.mxu0 0.0
    %88 = vmatpush.msra.mxu0 0.0
    %89 = vmatpush.msra.mxu0 0.0
    %90 = vmatpush.msra.mxu0 %v75
    %91 = vmatpush.msra.mxu0 %v64
    %92 = vmatpush.msra.mxu0 %v63
    %93 = vmatmul.f32.gmra.mxu0 %v68
    %v94 = vpop.f32.mrf.mxu0
    %v95 = vadd.f32 0.0, %v94
    %96 = vmatmul.f32.gmra.mxu0 %v71
    %v97 = vpop.f32.mrf.mxu0
    %v98 = vadd.f32 0.0, %v97
    %99 = vdwg.mxu0
    %vm100 = vcmask 64512
    %v102 = vsel %vm100, %v32, 0
    %v105 = vsel %vm100, %v33, 0
    %107 = vmatpush.msra.mxu0 0.0
    %108 = vmatpush.msra.mxu0 0.0
    %109 = vmatpush.msra.mxu0 0.0
    %110 = vmatpush.msra.mxu0 0.0
    %111 = vmatpush.msra.mxu0 0.0
    %112 = vmatpush.msra.mxu0 0.0
    %113 = vmatpush.msra.mxu0 0.0
    %114 = vmatpush.msra.mxu0 0.0
    %115 = vmatpush.msra.mxu0 0.0
    %116 = vmatpush.msra.mxu0 0.0
    %117 = vmatpush.msra.mxu0 0.0
    %118 = vmatpush.msra.mxu0 0.0
    %119 = vmatpush.msra.mxu0 0.0
    %120 = vmatpush.msra.mxu0 0.0
    %121 = vmatpush.msra.mxu0 0.0
    %122 = vmatpush.msra.mxu0 %v62
    %123 = vmatmul.f32.gmra.mxu0 %v102
    %v124 = vpop.f32.mrf.mxu0
    %v125 = vadd.f32 %v95, %v124
    %126 = vmatmul.f32.gmra.mxu0 %v105
    %v127 = vpop.f32.mrf.mxu0
    %v128 = vadd.f32 %v98, %v127
    %129 = vdwg.mxu0
    %v130 = vld [vmem:[%s3] sm:$0x1]
    %v131 = vperm.slane %v130, 0
    %v132 = vadd.f32 %v125, %v131
    %v133 = vadd.f32 %v128, %v131
    %v134 = vld [vmem:[%s3 + $0x1] sm:$0x1]
    %v135 = vperm.slane %v134, 0
    %v136 = vmax.f32 %v132, %v135
    %v137 = vmax.f32 %v133, %v135
    %138 = vset.pattern.permute.xlu0 7
    %139 = vperm.xlu0 %138, %v32
    %v140 = vpop.permute.xlu0 %139
    %142 = vset.pattern.permute.xlu0 7
    %143 = vperm.xlu0 %142, %v33
    %v144 = vpop.permute.xlu0 %143
    %v146 = vmul.f32 %v136, %v140
    %v147 = vmul.f32 %v137, %v144
    %vm148 = vcmask 195584
    %149 = vst.msk [vmem:[#allocation5] sm:$0xff] %vm148, %v146
    %150 = vst.msk [vmem:[#allocation5 + $0x8] sm:$0xff] %vm148, %v147
    // Predicated region
    $region22: #{tpu_custom_call.1} parent=1 // pred_check
      _
    $region23: #{tpu_custom_call.1} parent=1 // pred_check_branch
      %152 = sbr.rel (0) target = $region25
    $region24: #{tpu_custom_call.1} parent=1 // pred_region
      %154 = vsyncadd [#allocation4], 0
      %s155 = sshll.u32 [#allocation5], 4
      %s156 = int_to_ptr.vmem [resolvable:$true] %s155
      %s157 = sshll.u32 %s4, 4
      %s158 = int_to_ptr.hbm [resolvable:$true] %s157
      %163 = dma.vmem_to_hbm [thread:$0]  %s156, 256, %s158, [#allocation4], 128, 128, 8
    $region25: #{tpu_custom_call.1} parent=1 // pred_fallthru
      _
    // Predicated region
    $region26: #{tpu_custom_call.1} parent=1 // pred_check
      _
    $region27: #{tpu_custom_call.1} parent=1 // pred_check_branch
      %165 = sbr.rel (0) target = $region29
    $region28: #{tpu_custom_call.1} parent=1 // pred_region
      %167 = dma.done [#allocation4], 256
    $region29: #{tpu_custom_call.1} parent=1 // pred_fallthru
      _
    %168 = vsyncpa [#allocation3], 1
    %169 = vsyncpa [#allocation4], 1

</llo_original>
